<compile_context>
chip_gen: v6e
topology: v6e:2x2x1
jax: 0.10.0
libtpu: 0.0.40
codegen_flags: <defaults>
</compile_context>

<pallas_src>
import functools

import jax
import jax.numpy as jnp
from jax.experimental import pallas as pl
from jax.experimental.pallas import tpu as pltpu

EPS = 1e-5
_SLAB_W = 128  # lane width of the packed small-parameter slabs


def _pad_row(v, width=_SLAB_W):
    v = jnp.asarray(v, jnp.float32).reshape(-1)
    return jnp.pad(v, (0, width - v.shape[0]))


# ---------------------------------------------------------------------------
# Fused path: whole batch VMEM-resident, entire forward in ONE kernel.
# ---------------------------------------------------------------------------
def _fused_mlp_kernel(x_ref, w1_ref, w2_ref, w3_ref, p_ref, o_ref):
    """Full forward pass for one (whole-batch) block.

    p_ref rows (f32, lane-padded to 128):
      0 b1   1 g1   2 be1
      3 b2   4 g2   5 be2
      6 b3   7 g3   8 be3
      9 w_out (64)  10 [b_out]
    """
    n = x_ref.shape[0]
    inv_n = 1.0 / n
    d3 = w3_ref.shape[1]

    def dense_relu(a, w_ref, bias):
        h = jnp.dot(a.astype(jnp.bfloat16), w_ref[...],
                    preferred_element_type=jnp.float32)
        return jnp.maximum(h + bias, 0.0)

    def bn(h, gamma, beta):
        # Training-mode BatchNorm1d: biased variance over the batch, eps=1e-5.
        mean = jnp.sum(h, axis=0, keepdims=True) * inv_n
        var = jnp.maximum(
            jnp.sum(h * h, axis=0, keepdims=True) * inv_n - mean * mean, 0.0)
        scale = gamma * jax.lax.rsqrt(var + EPS)
        shift = beta - mean * scale
        return h * scale + shift

    h = dense_relu(x_ref[...], w1_ref, p_ref[0:1, :])
    h = bn(h, p_ref[1:2, :], p_ref[2:3, :])
    h = dense_relu(h, w2_ref, p_ref[3:4, :])
    h = bn(h, p_ref[4:5, :], p_ref[5:6, :])
    h = dense_relu(h, w3_ref, p_ref[6:7, :d3])
    h = bn(h, p_ref[7:8, :d3], p_ref[8:9, :d3])
    w_out = p_ref[9:10, :d3]
    b_out = p_ref[10:11, 0:1]
    o_ref[...] = jnp.sum(h * w_out, axis=1, keepdims=True) + b_out


def _make_fused_slab(p):
    return jnp.stack([
        _pad_row(p["b1"]), _pad_row(p["g1"]), _pad_row(p["be1"]),
        _pad_row(p["b2"]), _pad_row(p["g2"]), _pad_row(p["be2"]),
        _pad_row(p["b3"]), _pad_row(p["g3"]), _pad_row(p["be3"]),
        _pad_row(p["w4"]), _pad_row(p["b4"]),
    ])


def _fused_forward(x, w1, w2, w3, slab):
    batch = x.shape[0]
    # No grid: every operand is a full-array VMEM block; one kernel invocation.
    return pl.pallas_call(
        _fused_mlp_kernel,
        out_shape=jax.ShapeDtypeStruct((batch, 1), jnp.float32),
    )(x, w1, w2, w3, slab)


# ---------------------------------------------------------------------------
# Tiled path: batch grid, BN stats accumulated across tiles, BN folded into
# the next layer's kernel.
# ---------------------------------------------------------------------------
def _fused_layer_kernel(x_ref, w_ref, p_ref, h_ref, stats_ref,
                        *, f_in, f_out, batch, tile_b, ragged):
    """h = relu((x*scale + shift) @ W + b); accumulate per-feature sum / sumsq.

    p_ref rows: 0 = scale (f_in), 1 = shift (f_in), 2 = bias (f_out).
    stats_ref rows: 0 = sum(h), 1 = sum(h*h) over the full batch (revisited
    accumulator across the batch grid axis).
    """
    i = pl.program_id(0)

    @pl.when(i == 0)
    def _init():
        stats_ref[...] = jnp.zeros_like(stats_ref)

    scale = p_ref[0:1, :f_in]
    shift = p_ref[1:2, :f_in]
    bias = p_ref[2:3, :f_out]

    # Previous layer's BatchNorm folded into an affine; elementwise kept in f32.
    xn = x_ref[...] * scale + shift
    h = jnp.dot(xn.astype(jnp.bfloat16), w_ref[...],
                preferred_element_type=jnp.float32)
    h = jnp.maximum(h + bias, 0.0)

    if ragged:
        # Zero rows past the true batch so they do not pollute the BN stats
        # (out-of-bounds rows of the output tile are discarded on writeback).
        row = jax.lax.broadcasted_iota(jnp.int32, (tile_b, 1), 0) + i * tile_b
        h = jnp.where(row < batch, h, 0.0)

    h_ref[...] = h
    stats_ref[0:1, :] += jnp.sum(h, axis=0, keepdims=True)
    stats_ref[1:2, :] += jnp.sum(h * h, axis=0, keepdims=True)


def _final_layer_kernel(x_ref, p_ref, o_ref, *, f_in):
    """out = (x*scale + shift) @ w_out + b_out  (single output column).

    p_ref rows: 0 = scale, 1 = shift, 2 = w_out, 3 = [b_out].
    """
    scale = p_ref[0:1, :f_in]
    shift = p_ref[1:2, :f_in]
    w_row = p_ref[2:3, :f_in]
    bias = p_ref[3:4, 0:1]
    xn = x_ref[...] * scale + shift
    o_ref[...] = jnp.sum(xn * w_row, axis=1, keepdims=True) + bias


def _fused_layer(x, w_bf16, slab, *, f_out, tile_b):
    batch, f_in = x.shape
    nb = pl.cdiv(batch, tile_b)
    ragged = (batch % tile_b) != 0
    kernel = functools.partial(_fused_layer_kernel, f_in=f_in, f_out=f_out,
                               batch=batch, tile_b=tile_b, ragged=ragged)
    return pl.pallas_call(
        kernel,
        out_shape=(jax.ShapeDtypeStruct((batch, f_out), jnp.float32),
                   jax.ShapeDtypeStruct((2, f_out), jnp.float32)),
        grid=(nb,),
        in_specs=[
            pl.BlockSpec((tile_b, f_in), lambda i: (i, 0)),  # activations: streamed
            pl.BlockSpec((f_in, f_out), lambda i: (0, 0)),   # weights: VMEM-resident
            pl.BlockSpec(slab.shape, lambda i: (0, 0)),      # packed small params
        ],
        out_specs=(
            pl.BlockSpec((tile_b, f_out), lambda i: (i, 0)),
            pl.BlockSpec((2, f_out), lambda i: (0, 0)),      # revisited accumulator
        ),
        compiler_params=pltpu.CompilerParams(
            dimension_semantics=("arbitrary",)),             # sequential stats reduction
    )(x, w_bf16, slab)


def _final_layer(x, slab, *, tile_b):
    batch, f_in = x.shape
    nb = pl.cdiv(batch, tile_b)
    kernel = functools.partial(_final_layer_kernel, f_in=f_in)
    return pl.pallas_call(
        kernel,
        out_shape=jax.ShapeDtypeStruct((batch, 1), jnp.float32),
        grid=(nb,),
        in_specs=[
            pl.BlockSpec((tile_b, f_in), lambda i: (i, 0)),
            pl.BlockSpec(slab.shape, lambda i: (0, 0)),
        ],
        out_specs=pl.BlockSpec((tile_b, 1), lambda i: (i, 0)),
        compiler_params=pltpu.CompilerParams(
            dimension_semantics=("parallel",)),              # shards across TCs on v7x
    )(x, slab)


def _bn_fold(stats, gamma, beta, batch):
    """Fold training-mode BatchNorm1d into a per-feature (scale, shift) affine."""
    mean = stats[0] / batch
    var = jnp.maximum(stats[1] / batch - mean * mean, 0.0)  # biased variance, f32
    inv = jax.lax.rsqrt(var + EPS)
    scale = jnp.asarray(gamma, jnp.float32).reshape(-1) * inv
    shift = jnp.asarray(beta, jnp.float32).reshape(-1) - mean * scale
    return scale, shift


# ---------------------------------------------------------------------------
# Top-level forward
# ---------------------------------------------------------------------------
@functools.partial(jax.jit, static_argnames=("block_b", "fuse_threshold"))
def binary_classification_forward(x, params, block_b=256, fuse_threshold=2048):
    """x: (B, 41) float32. params: dict of weights/biases/bn params."""
    batch = x.shape[0]
    x = x.astype(jnp.float32)

    # bf16 weights for the MXU (f32 accumulation inside the kernels).
    w1 = params["w1"].astype(jnp.bfloat16)
    w2 = params["w2"].astype(jnp.bfloat16)
    w3 = params["w3"].astype(jnp.bfloat16)

    if batch <= fuse_threshold:
        # Fast path: single kernel, whole batch VMEM-resident, BN in-kernel.
        return _fused_forward(x, w1, w2, w3, _make_fused_slab(params))

    # Scalable path: batch-tiled, BN stats accumulated across tiles.
    tile_b = block_b
    if tile_b % 8 != 0:
        raise ValueError("block_b must be a multiple of 8")

    # Layer 1 (no incoming BatchNorm -> identity scale/shift).
    slab1 = jnp.stack([_pad_row(jnp.ones((41,))), _pad_row(jnp.zeros((41,))),
                       _pad_row(params["b1"])])
    h1, st1 = _fused_layer(x, w1, slab1, f_out=128, tile_b=tile_b)

    # Layer 2 (applies batchnorm1 folded into scale/shift).
    s1, t1 = _bn_fold(st1, params["g1"], params["be1"], batch)
    slab2 = jnp.stack([_pad_row(s1), _pad_row(t1), _pad_row(params["b2"])])
    h2, st2 = _fused_layer(h1, w2, slab2, f_out=128, tile_b=tile_b)

    # Layer 3 (applies batchnorm2).
    s2, t2 = _bn_fold(st2, params["g2"], params["be2"], batch)
    slab3 = jnp.stack([_pad_row(s2), _pad_row(t2), _pad_row(params["b3"])])
    h3, st3 = _fused_layer(h2, w3, slab3, f_out=64, tile_b=tile_b)

    # Output layer (applies bn3).
    s3, t3 = _bn_fold(st3, params["g3"], params["be3"], batch)
    slab4 = jnp.stack([_pad_row(s3), _pad_row(t3), _pad_row(params["w4"]),
                       _pad_row(params["b4"])])
    return _final_layer(h3, slab4, tile_b=tile_b)


# ---------------------------------------------------------------------------
# Params / reference / demo
# ---------------------------------------------------------------------------
def init_params(key):
    """Deterministic init mimicking nn.Linear shapes; weights stored (F_in, F_out)."""
    dims = [(41, 128), (128, 128), (128, 64), (64, 1)]
    params = {}
    keys = jax.random.split(key, 2 * len(dims))
    for i, (fin, fout) in enumerate(dims):
        bound = 1.0 / (fin ** 0.5)
        params[f"w{i + 1}"] = jax.random.uniform(keys[2 * i], (fin, fout),
                                                 jnp.float32, -bound, bound)
        params[f"b{i + 1}"] = jax.random.uniform(keys[2 * i + 1], (1, fout),
                                                 jnp.float32, -bound, bound)
    for name, d in (("1", 128), ("2", 128), ("3", 64)):
        params[f"g{name}"] = jnp.ones((1, d), jnp.float32)    # BatchNorm gamma
        params[f"be{name}"] = jnp.zeros((1, d), jnp.float32)  # BatchNorm beta
    return params


def reference_forward(x, p):
    """Pure-jnp reference mirroring the kernels' precision policy
    (bf16 MXU operands, f32 accumulation, f32 one-pass training-mode BN)."""
    batch = x.shape[0]

    def dot_bf16(a, w):
        return jnp.dot(a.astype(jnp.bfloat16), w.astype(jnp.bfloat16),
                       preferred_element_type=jnp.float32)

    def fold(h, g, be):
        mean = jnp.sum(h, axis=0) / batch
        var = jnp.maximum(jnp.sum(h * h, axis=0) / batch - mean * mean, 0.0)
        inv = jax.lax.rsqrt(var + EPS)
        scale = g.reshape(-1) * inv
        shift = be.reshape(-1) - mean * scale
        return scale, shift

    h1 = jnp.maximum(dot_bf16(x, p["w1"]) + p["b1"], 0.0)
    s1, t1 = fold(h1, p["g1"], p["be1"])
    h2 = jnp.maximum(dot_bf16(h1 * s1 + t1, p["w2"]) + p["b2"], 0.0)
    s2, t2 = fold(h2, p["g2"], p["be2"])
    h3 = jnp.maximum(dot_bf16(h2 * s2 + t2, p["w3"]) + p["b3"], 0.0)
    s3, t3 = fold(h3, p["g3"], p["be3"])
    return (h3 * s3 + t3) @ p["w4"] + p["b4"]


if __name__ == "__main__":
    key = jax.random.PRNGKey(0)
    k_params, k_x = jax.random.split(key)
    params = init_params(k_params)

    B = 16  # small batch; BatchNorm training-mode stats span the full batch
    x = jax.random.normal(k_x, (B, 41), dtype=jnp.float32)

    # Fast path: whole forward fused into one kernel, batch VMEM-resident.
    out_fused = jax.block_until_ready(binary_classification_forward(x, params))

    # Scalable path forced on (block_b=8 -> 2 batch tiles per layer): exercises
    # the batch grid, VMEM-resident weights and cross-tile BN accumulation.
    out_tiled = jax.block_until_ready(
        binary_classification_forward(x, params, block_b=8, fuse_threshold=0))

    ref = reference_forward(x, params)
    assert out_fused.shape == (B, 1) and out_tiled.shape == (B, 1)
    err_f = jnp.max(jnp.abs(out_fused - ref))
    err_t = jnp.max(jnp.abs(out_tiled - ref))
    assert jnp.allclose(out_fused, ref, atol=5e-3, rtol=5e-3), f"fused diff {err_f}"
    assert jnp.allclose(out_tiled, ref, atol=5e-3, rtol=5e-3), f"tiled diff {err_t}"

    print("KERNEL_OK")
</pallas_src>

<mosaic_0001>
module attributes {stable_mosaic.version = 11 : i64} {
  func.func @_fused_mlp_kernel(%arg0: memref<16x41xf32, #tpu.memory_space<vmem>>, %arg1: memref<41x128xbf16, #tpu.memory_space<vmem>>, %arg2: memref<128x128xbf16, #tpu.memory_space<vmem>>, %arg3: memref<128x64xbf16, #tpu.memory_space<vmem>>, %arg4: memref<11x128xf32, #tpu.memory_space<vmem>>, %arg5: memref<16x1xf32, #tpu.memory_space<vmem>>) attributes {dimension_semantics = [], scalar_prefetch = 0 : i64, scratch_operands = 0 : i64, tpu.core_type = #tpu.core_type<tc>} {
    %c0 = arith.constant 0 : index
    %c0_0 = arith.constant 0 : index
    %0 = vector.load %arg0[%c0, %c0_0] : memref<16x41xf32, #tpu.memory_space<vmem>>, vector<16x41xf32>
    %c0_1 = arith.constant 0 : index
    %c0_2 = arith.constant 0 : index
    %1 = vector.load %arg4[%c0_1, %c0_2] : memref<11x128xf32, #tpu.memory_space<vmem>>, vector<1x128xf32>
    %2 = arith.truncf %0 : vector<16x41xf32> to vector<16x41xbf16>
    %c0_3 = arith.constant 0 : index
    %c0_4 = arith.constant 0 : index
    %3 = vector.load %arg1[%c0_3, %c0_4] : memref<41x128xbf16, #tpu.memory_space<vmem>>, vector<41x128xbf16>
    %cst = arith.constant dense<0.000000e+00> : vector<16x128xf32>
    %4 = tpu.matmul %2, %3, %cst {dimension_numbers = #tpu.dot_dimension_numbers<[1], [0], [0], [1], [0, 0, 1, 1], [], []>} : vector<16x41xbf16>, vector<41x128xbf16>, vector<16x128xf32> -> vector<16x128xf32>
    %5 = vector.broadcast %1 : vector<1x128xf32> to vector<16x128xf32>
    %6 = arith.addf %4, %5 : vector<16x128xf32>
    %cst_5 = arith.constant 0.000000e+00 : f32
    %7 = vector.broadcast %cst_5 : f32 to vector<16x128xf32>
    %8 = arith.maximumf %6, %7 : vector<16x128xf32>
    %c1 = arith.constant 1 : index
    %c0_6 = arith.constant 0 : index
    %9 = vector.load %arg4[%c1, %c0_6] : memref<11x128xf32, #tpu.memory_space<vmem>>, vector<1x128xf32>
    %c2 = arith.constant 2 : index
    %c0_7 = arith.constant 0 : index
    %10 = vector.load %arg4[%c2, %c0_7] : memref<11x128xf32, #tpu.memory_space<vmem>>, vector<1x128xf32>
    %cst_8 = arith.constant dense<0.000000e+00> : vector<128xf32>
    %11 = vector.multi_reduction <add>, %8, %cst_8 [0] : vector<16x128xf32> to vector<128xf32>
    %12 = vector.shape_cast %11 : vector<128xf32> to vector<1x128xf32>
    %cst_9 = arith.constant 6.250000e-02 : f32
    %13 = vector.broadcast %cst_9 : f32 to vector<1x128xf32>
    %14 = arith.mulf %12, %13 : vector<1x128xf32>
    %15 = arith.mulf %8, %8 : vector<16x128xf32>
    %cst_10 = arith.constant dense<0.000000e+00> : vector<128xf32>
    %16 = vector.multi_reduction <add>, %15, %cst_10 [0] : vector<16x128xf32> to vector<128xf32>
    %17 = vector.shape_cast %16 : vector<128xf32> to vector<1x128xf32>
    %cst_11 = arith.constant 6.250000e-02 : f32
    %18 = vector.broadcast %cst_11 : f32 to vector<1x128xf32>
    %19 = arith.mulf %17, %18 : vector<1x128xf32>
    %20 = arith.mulf %14, %14 : vector<1x128xf32>
    %21 = arith.subf %19, %20 : vector<1x128xf32>
    %cst_12 = arith.constant 0.000000e+00 : f32
    %22 = vector.broadcast %cst_12 : f32 to vector<1x128xf32>
    %23 = arith.maximumf %21, %22 : vector<1x128xf32>
    %cst_13 = arith.constant 9.99999974E-6 : f32
    %24 = vector.broadcast %cst_13 : f32 to vector<1x128xf32>
    %25 = arith.addf %23, %24 : vector<1x128xf32>
    %26 = math.rsqrt %25 : vector<1x128xf32>
    %27 = arith.mulf %9, %26 : vector<1x128xf32>
    %28 = arith.mulf %14, %27 : vector<1x128xf32>
    %29 = arith.subf %10, %28 : vector<1x128xf32>
    %30 = vector.broadcast %27 : vector<1x128xf32> to vector<16x128xf32>
    %31 = arith.mulf %8, %30 : vector<16x128xf32>
    %32 = vector.broadcast %29 : vector<1x128xf32> to vector<16x128xf32>
    %33 = arith.addf %31, %32 : vector<16x128xf32>
    %c3 = arith.constant 3 : index
    %c0_14 = arith.constant 0 : index
    %34 = vector.load %arg4[%c3, %c0_14] : memref<11x128xf32, #tpu.memory_space<vmem>>, vector<1x128xf32>
    %35 = arith.truncf %33 : vector<16x128xf32> to vector<16x128xbf16>
    %c0_15 = arith.constant 0 : index
    %c0_16 = arith.constant 0 : index
    %36 = vector.load %arg2[%c0_15, %c0_16] : memref<128x128xbf16, #tpu.memory_space<vmem>>, vector<128x128xbf16>
    %cst_17 = arith.constant dense<0.000000e+00> : vector<16x128xf32>
    %37 = tpu.matmul %35, %36, %cst_17 {dimension_numbers = #tpu.dot_dimension_numbers<[1], [0], [0], [1], [0, 0, 1, 1], [], []>} : vector<16x128xbf16>, vector<128x128xbf16>, vector<16x128xf32> -> vector<16x128xf32>
    %38 = vector.broadcast %34 : vector<1x128xf32> to vector<16x128xf32>
    %39 = arith.addf %37, %38 : vector<16x128xf32>
    %cst_18 = arith.constant 0.000000e+00 : f32
    %40 = vector.broadcast %cst_18 : f32 to vector<16x128xf32>
    %41 = arith.maximumf %39, %40 : vector<16x128xf32>
    %c4 = arith.constant 4 : index
    %c0_19 = arith.constant 0 : index
    %42 = vector.load %arg4[%c4, %c0_19] : memref<11x128xf32, #tpu.memory_space<vmem>>, vector<1x128xf32>
    %c5 = arith.constant 5 : index
    %c0_20 = arith.constant 0 : index
    %43 = vector.load %arg4[%c5, %c0_20] : memref<11x128xf32, #tpu.memory_space<vmem>>, vector<1x128xf32>
    %cst_21 = arith.constant dense<0.000000e+00> : vector<128xf32>
    %44 = vector.multi_reduction <add>, %41, %cst_21 [0] : vector<16x128xf32> to vector<128xf32>
    %45 = vector.shape_cast %44 : vector<128xf32> to vector<1x128xf32>
    %cst_22 = arith.constant 6.250000e-02 : f32
    %46 = vector.broadcast %cst_22 : f32 to vector<1x128xf32>
    %47 = arith.mulf %45, %46 : vector<1x128xf32>
    %48 = arith.mulf %41, %41 : vector<16x128xf32>
    %cst_23 = arith.constant dense<0.000000e+00> : vector<128xf32>
    %49 = vector.multi_reduction <add>, %48, %cst_23 [0] : vector<16x128xf32> to vector<128xf32>
    %50 = vector.shape_cast %49 : vector<128xf32> to vector<1x128xf32>
    %cst_24 = arith.constant 6.250000e-02 : f32
    %51 = vector.broadcast %cst_24 : f32 to vector<1x128xf32>
    %52 = arith.mulf %50, %51 : vector<1x128xf32>
    %53 = arith.mulf %47, %47 : vector<1x128xf32>
    %54 = arith.subf %52, %53 : vector<1x128xf32>
    %cst_25 = arith.constant 0.000000e+00 : f32
    %55 = vector.broadcast %cst_25 : f32 to vector<1x128xf32>
    %56 = arith.maximumf %54, %55 : vector<1x128xf32>
    %cst_26 = arith.constant 9.99999974E-6 : f32
    %57 = vector.broadcast %cst_26 : f32 to vector<1x128xf32>
    %58 = arith.addf %56, %57 : vector<1x128xf32>
    %59 = math.rsqrt %58 : vector<1x128xf32>
    %60 = arith.mulf %42, %59 : vector<1x128xf32>
    %61 = arith.mulf %47, %60 : vector<1x128xf32>
    %62 = arith.subf %43, %61 : vector<1x128xf32>
    %63 = vector.broadcast %60 : vector<1x128xf32> to vector<16x128xf32>
    %64 = arith.mulf %41, %63 : vector<16x128xf32>
    %65 = vector.broadcast %62 : vector<1x128xf32> to vector<16x128xf32>
    %66 = arith.addf %64, %65 : vector<16x128xf32>
    %c6 = arith.constant 6 : index
    %c0_27 = arith.constant 0 : index
    %67 = vector.load %arg4[%c6, %c0_27] : memref<11x128xf32, #tpu.memory_space<vmem>>, vector<1x64xf32>
    %68 = arith.truncf %66 : vector<16x128xf32> to vector<16x128xbf16>
    %c0_28 = arith.constant 0 : index
    %c0_29 = arith.constant 0 : index
    %69 = vector.load %arg3[%c0_28, %c0_29] : memref<128x64xbf16, #tpu.memory_space<vmem>>, vector<128x64xbf16>
    %cst_30 = arith.constant dense<0.000000e+00> : vector<16x64xf32>
    %70 = tpu.matmul %68, %69, %cst_30 {dimension_numbers = #tpu.dot_dimension_numbers<[1], [0], [0], [1], [0, 0, 1, 1], [], []>} : vector<16x128xbf16>, vector<128x64xbf16>, vector<16x64xf32> -> vector<16x64xf32>
    %71 = vector.broadcast %67 : vector<1x64xf32> to vector<16x64xf32>
    %72 = arith.addf %70, %71 : vector<16x64xf32>
    %cst_31 = arith.constant 0.000000e+00 : f32
    %73 = vector.broadcast %cst_31 : f32 to vector<16x64xf32>
    %74 = arith.maximumf %72, %73 : vector<16x64xf32>
    %c7 = arith.constant 7 : index
    %c0_32 = arith.constant 0 : index
    %75 = vector.load %arg4[%c7, %c0_32] : memref<11x128xf32, #tpu.memory_space<vmem>>, vector<1x64xf32>
    %c8 = arith.constant 8 : index
    %c0_33 = arith.constant 0 : index
    %76 = vector.load %arg4[%c8, %c0_33] : memref<11x128xf32, #tpu.memory_space<vmem>>, vector<1x64xf32>
    %cst_34 = arith.constant dense<0.000000e+00> : vector<64xf32>
    %77 = vector.multi_reduction <add>, %74, %cst_34 [0] : vector<16x64xf32> to vector<64xf32>
    %78 = vector.shape_cast %77 : vector<64xf32> to vector<1x64xf32>
    %cst_35 = arith.constant 6.250000e-02 : f32
    %79 = vector.broadcast %cst_35 : f32 to vector<1x64xf32>
    %80 = arith.mulf %78, %79 : vector<1x64xf32>
    %81 = arith.mulf %74, %74 : vector<16x64xf32>
    %cst_36 = arith.constant dense<0.000000e+00> : vector<64xf32>
    %82 = vector.multi_reduction <add>, %81, %cst_36 [0] : vector<16x64xf32> to vector<64xf32>
    %83 = vector.shape_cast %82 : vector<64xf32> to vector<1x64xf32>
    %cst_37 = arith.constant 6.250000e-02 : f32
    %84 = vector.broadcast %cst_37 : f32 to vector<1x64xf32>
    %85 = arith.mulf %83, %84 : vector<1x64xf32>
    %86 = arith.mulf %80, %80 : vector<1x64xf32>
    %87 = arith.subf %85, %86 : vector<1x64xf32>
    %cst_38 = arith.constant 0.000000e+00 : f32
    %88 = vector.broadcast %cst_38 : f32 to vector<1x64xf32>
    %89 = arith.maximumf %87, %88 : vector<1x64xf32>
    %cst_39 = arith.constant 9.99999974E-6 : f32
    %90 = vector.broadcast %cst_39 : f32 to vector<1x64xf32>
    %91 = arith.addf %89, %90 : vector<1x64xf32>
    %92 = math.rsqrt %91 : vector<1x64xf32>
    %93 = arith.mulf %75, %92 : vector<1x64xf32>
    %94 = arith.mulf %80, %93 : vector<1x64xf32>
    %95 = arith.subf %76, %94 : vector<1x64xf32>
    %96 = vector.broadcast %93 : vector<1x64xf32> to vector<16x64xf32>
    %97 = arith.mulf %74, %96 : vector<16x64xf32>
    %98 = vector.broadcast %95 : vector<1x64xf32> to vector<16x64xf32>
    %99 = arith.addf %97, %98 : vector<16x64xf32>
    %c9 = arith.constant 9 : index
    %c0_40 = arith.constant 0 : index
    %100 = vector.load %arg4[%c9, %c0_40] : memref<11x128xf32, #tpu.memory_space<vmem>>, vector<1x64xf32>
    %c10 = arith.constant 10 : index
    %c0_41 = arith.constant 0 : index
    %101 = vector.load %arg4[%c10, %c0_41] : memref<11x128xf32, #tpu.memory_space<vmem>>, vector<1x1xf32>
    %102 = vector.broadcast %100 : vector<1x64xf32> to vector<16x64xf32>
    %103 = arith.mulf %99, %102 : vector<16x64xf32>
    %cst_42 = arith.constant dense<0.000000e+00> : vector<16xf32>
    %104 = vector.multi_reduction <add>, %103, %cst_42 [1] : vector<16x64xf32> to vector<16xf32>
    %105 = vector.shape_cast %104 : vector<16xf32> to vector<16x1xf32>
    %106 = vector.broadcast %101 : vector<1x1xf32> to vector<16x1xf32>
    %107 = arith.addf %105, %106 : vector<16x1xf32>
    %c0_43 = arith.constant 0 : index
    %c0_44 = arith.constant 0 : index
    %108 = vector.load %arg5[%c0_43, %c0_44] : memref<16x1xf32, #tpu.memory_space<vmem>>, vector<16x1xf32>
    tpu.vector_store %arg5[%c0_43, %c0_44], %107 {strides = array<i32>} : memref<16x1xf32, #tpu.memory_space<vmem>>, vector<16x1xf32>,
    return
  }
}

</mosaic_0001>

<llo_original>
// kernel: binary_classification_forward.1
$region0: #{binary_classification_forward.1}
  #allocation0 [shape = 'u32[]', space=smem, size = 0x4, offset = 0x4, fixed_abs, tag = 'smem constant byte address 0x4 - core index']
  #allocation1 [shape = 'u32[144,128]{1,0:T(1,128)}', space=vmem, size = 0x12000, scoped, tag = 'internal scratch']
  %s0 = inlined_call_operand.vmem [shape: f32[16,41], index: 0, kind: input, shape index: {}]
  %s1 = inlined_call_operand.vmem [shape: bf16[41,128], index: 1, kind: input, shape index: {}]
  %s2 = inlined_call_operand.vmem [shape: bf16[128,128], index: 2, kind: input, shape index: {}]
  %s3 = inlined_call_operand.vmem [shape: bf16[128,64], index: 3, kind: input, shape index: {}]
  %s4 = inlined_call_operand.vmem [shape: f32[11,128], index: 4, kind: input, shape index: {}]
  %s5 = inlined_call_operand.vmem [shape: f32[16,1], index: 5, kind: output, shape index: {}]
  %s6 = sld [smem:[#allocation0]]
  $region30: #{binary_classification_forward.1} parent=0
    _
  %s8 = ssub.s32 1, %s6
  %s9 = scalar_select 0, %s8, %s6
  // Predicated region
  $region2: #{binary_classification_forward.1} parent=0 // pred_check
    _
  $region3: #{binary_classification_forward.1} parent=0 // pred_check_branch
    %11 = sbr.rel (0) target = $region5
  $region4: #{binary_classification_forward.1} parent=0 // pred_region
    _
  $region5: #{binary_classification_forward.1} parent=0 // pred_fallthru
    _
  // Predicated region
  $region6: #{binary_classification_forward.1} parent=0 // pred_check
    _
  $region7: #{binary_classification_forward.1} parent=0 // pred_check_branch
    %13 = sbr.rel (0) target = $region9
  $region8: #{binary_classification_forward.1} parent=0 // pred_region
    _
  $region9: #{binary_classification_forward.1} parent=0 // pred_fallthru
    _
  // Predicated region
  $region10: #{binary_classification_forward.1} parent=0 // pred_check
    _
  $region11: #{binary_classification_forward.1} parent=0 // pred_check_branch
    %15 = sbr.rel (0) target = $region13
  $region12: #{binary_classification_forward.1} parent=0 // pred_region
    _
  $region13: #{binary_classification_forward.1} parent=0 // pred_fallthru
    _
  // Predicated region
  $region14: #{binary_classification_forward.1} parent=0 // pred_check
    _
  $region15: #{binary_classification_forward.1} parent=0 // pred_check_branch
    %17 = sbr.rel (0) target = $region17
  $region16: #{binary_classification_forward.1} parent=0 // pred_region
    _
  $region17: #{binary_classification_forward.1} parent=0 // pred_fallthru
    _
  // Predicated region
  $region18: #{binary_classification_forward.1} parent=0 // pred_check
    _
  $region19: #{binary_classification_forward.1} parent=0 // pred_check_branch
    %19 = sbr.rel (0) target = $region21
  $region20: #{binary_classification_forward.1} parent=0 // pred_region
    _
  $region21: #{binary_classification_forward.1} parent=0 // pred_fallthru
    _
  %v21 = vld [vmem:[%s0] sm:$0xff]
  %v22 = vld [vmem:[%s0 + $0x8] sm:$0xff]
  %v23 = vld [vmem:[%s4] sm:$0x1]
  %v24 = vpack.c.bf16 %v22, %v21
  %v25 = vld [vmem:[%s1] sm:$0xf]
  %v26 = vld [vmem:[%s1 + $0x4] sm:$0xf]
  %v27 = vld [vmem:[%s1 + $0x8] sm:$0xf]
  %v28 = vld [vmem:[%s1 + $0xc] sm:$0xf]
  %v29 = vld [vmem:[%s1 + $0x10] sm:$0xf]
  %v30 = vld [vmem:[%s1 + $0x14] sm:$0x1]
  %v31 = vlaneseq
  %v32 = vshrl.u32 %v31, 7
  %v33 = vsub.s32 0, %v32
  %v34 = vrot.slane %v23, %v33
  %v41 = vunpack.c.l.b16 %v25
  %v42 = vunpack.c.l.b16 %v26
  %v43 = vunpack.c.l.b16 %v27
  %v44 = vunpack.c.l.b16 %v28
  %v45 = vunpack.c.l.b16 %v29
  %v46 = vunpack.c.l.b16 %v30
  %v47 = vpack.c.b16 %v42, %v41
  %v48 = vpack.c.b16 %v44, %v43
  %v49 = vpack.c.b16 %v46, %v45
  %vm52 = vcmask 334848
  %v54 = vsel %vm52, %v24, 0
  %vm56 = vcmask 1043456
  %vm57 = vcmask 1044480
  %v58 = vsel %vm56, 4294967295, 65535
  %v59 = vsel %vm57, %v58, 0
  %v61 = vand.u32 %v49, %v59
  %63 = vmatprep.subr.bf16.mxu0 0
  %64 = vmatpush1.bf16.msra.mxu0 0
  %65 = vmatprep.subr.bf16.mxu0 0
  %66 = vmatpush1.bf16.msra.mxu0 0
  %67 = vmatprep.subr.bf16.mxu0 0
  %68 = vmatpush1.bf16.msra.mxu0 0
  %69 = vmatprep.subr.bf16.mxu0 0
  %70 = vmatpush1.bf16.msra.mxu0 0
  %71 = vmatprep.subr.bf16.mxu0 0
  %72 = vmatpush1.bf16.msra.mxu0 0
  %73 = vmatprep.subr.bf16.mxu0 0
  %74 = vmatpush1.bf16.msra.mxu0 %v61
  %75 = vmatprep.subr.bf16.mxu0 0
  %76 = vmatpush1.bf16.msra.mxu0 %v48
  %77 = vmatprep.subr.bf16.mxu0 0
  %78 = vmatpush1.bf16.msra.mxu0 %v47
  %79 = vmatprep.subr.bf16.mxu0 0
  %80 = vmatpush2.bf16.msra.mxu0 0
  %81 = vmatprep.subr.bf16.mxu0 0
  %82 = vmatpush2.bf16.msra.mxu0 0
  %83 = vmatprep.subr.bf16.mxu0 0
  %84 = vmatpush2.bf16.msra.mxu0 0
  %85 = vmatprep.subr.bf16.mxu0 0
  %86 = vmatpush2.bf16.msra.mxu0 0
  %87 = vmatprep.subr.bf16.mxu0 0
  %88 = vmatpush2.bf16.msra.mxu0 0
  %89 = vmatprep.subr.bf16.mxu0 0
  %90 = vmatpush2.bf16.msra.mxu0 0
  %91 = vmatprep.subr.bf16.mxu0 0
  %92 = vmatpush2.bf16.msra.mxu0 0
  %93 = vmatprep.subr.bf16.mxu0 0
  %94 = vmatpush2.bf16.msra.mxu0 0
  %95 = vmatprep.mubr.bf16.mxu0 0
  %96 = vmatmul.mubr.bf16.gmra.mxu0 %v54
  %v97 = vpop.f32.mrf.mxu0
  %v98 = vadd.f32 %v34, %v97
  %v99 = vpop.f32.mrf.mxu0
  %v100 = vpop.f32.mrf.mxu0
  %v101 = vadd.f32 %v34, %v100
  %v102 = vpop.f32.mrf.mxu0
  %103 = vdwg.mxu0
  %v104 = vmax.f32 %v98, 0.0
  %v105 = vmax.f32 %v101, 0.0
  %v106 = vld [vmem:[%s4 + $0x1] sm:$0x1]
  %v107 = vld [vmem:[%s4 + $0x2] sm:$0x1]
  %v108 = vadd.f32 %v104, %v105
  %v109 = vrot.slane %v108, 4
  %v110 = vadd.f32 %v108, %v109
  %v111 = vrot.slane %v110, 2
  %v112 = vadd.f32 %v110, %v111
  %v113 = vrot.slane %v112, 1
  %v114 = vadd.f32 %v112, %v113
  %v115 = vmul.f32 %v114, 0.0625
  %v116 = vmul.f32 %v104, %v104
  %v117 = vmul.f32 %v105, %v105
  %v118 = vadd.f32 %v116, %v117
  %v119 = vrot.slane %v118, 4
  %v120 = vadd.f32 %v118, %v119
  %v121 = vrot.slane %v120, 2
  %v122 = vadd.f32 %v120, %v121
  %v123 = vrot.slane %v122, 1
  %v124 = vadd.f32 %v122, %v123
  %v125 = vmul.f32 %v124, 0.0625
  %v126 = vmul.f32 %v115, %v115
  %v127 = vsub.f32 %v125, %v126
  %v128 = vmax.f32 %v127, 0.0
  %v129 = vadd.f32 %v128, 1e-05
  %v130 = vrsqrt.pop %v129
  %v131 = vmul.f32 %v106, %v130
  %v132 = vmul.f32 %v115, %v131
  %v133 = vsub.f32 %v107, %v132
  %v134 = vlaneseq
  %v135 = vshrl.u32 %v134, 7
  %v136 = vsub.s32 0, %v135
  %v137 = vrot.slane %v131, %v136
  %v138 = vmul.f32 %v104, %v137
  %v139 = vmul.f32 %v105, %v137
  %v140 = vlaneseq
  %v141 = vshrl.u32 %v140, 7
  %v142 = vsub.s32 0, %v141
  %v143 = vrot.slane %v133, %v142
  %v144 = vadd.f32 %v138, %v143
  %v145 = vadd.f32 %v139, %v143
  %v146 = vld [vmem:[%s4 + $0x3] sm:$0x1]
  %v147 = vpack.c.bf16 %v145, %v144
  %v148 = vld [vmem:[%s2] sm:$0xf]
  %v149 = vld [vmem:[%s2 + $0x4] sm:$0xf]
  %v150 = vld [vmem:[%s2 + $0x8] sm:$0xf]
  %v151 = vld [vmem:[%s2 + $0xc] sm:$0xf]
  %v152 = vld [vmem:[%s2 + $0x10] sm:$0xf]
  %v153 = vld [vmem:[%s2 + $0x14] sm:$0xf]
  %v154 = vld [vmem:[%s2 + $0x18] sm:$0xf]
  %v155 = vld [vmem:[%s2 + $0x1c] sm:$0xf]
  %v156 = vld [vmem:[%s2 + $0x20] sm:$0xf]
  %v157 = vld [vmem:[%s2 + $0x24] sm:$0xf]
  %v158 = vld [vmem:[%s2 + $0x28] sm:$0xf]
  %v159 = vld [vmem:[%s2 + $0x2c] sm:$0xf]
  %v160 = vld [vmem:[%s2 + $0x30] sm:$0xf]
  %v161 = vld [vmem:[%s2 + $0x34] sm:$0xf]
  %v162 = vld [vmem:[%s2 + $0x38] sm:$0xf]
  %v163 = vld [vmem:[%s2 + $0x3c] sm:$0xf]
  %v164 = vlaneseq
  %v165 = vshrl.u32 %v164, 7
  %v166 = vsub.s32 0, %v165
  %v167 = vrot.slane %v146, %v166
  %v184 = vunpack.c.l.b16 %v148
  %v185 = vunpack.c.l.b16 %v149
  %v186 = vunpack.c.l.b16 %v150
  %v187 = vunpack.c.l.b16 %v151
  %v188 = vunpack.c.l.b16 %v152
  %v189 = vunpack.c.l.b16 %v153
  %v190 = vunpack.c.l.b16 %v154
  %v191 = vunpack.c.l.b16 %v155
  %v192 = vunpack.c.l.b16 %v156
  %v193 = vunpack.c.l.b16 %v157
  %v194 = vunpack.c.l.b16 %v158
  %v195 = vunpack.c.l.b16 %v159
  %v196 = vunpack.c.l.b16 %v160
  %v197 = vunpack.c.l.b16 %v161
  %v198 = vunpack.c.l.b16 %v162
  %v199 = vunpack.c.l.b16 %v163
  %v200 = vpack.c.b16 %v185, %v184
  %v201 = vpack.c.b16 %v187, %v186
  %v202 = vpack.c.b16 %v189, %v188
  %v203 = vpack.c.b16 %v191, %v190
  %v204 = vpack.c.b16 %v193, %v192
  %v205 = vpack.c.b16 %v195, %v194
  %v206 = vpack.c.b16 %v197, %v196
  %v207 = vpack.c.b16 %v199, %v198
  %216 = vmatprep.subr.bf16.mxu0 0
  %217 = vmatpush1.bf16.msra.mxu0 %v207
  %218 = vmatprep.subr.bf16.mxu0 0
  %219 = vmatpush1.bf16.msra.mxu0 %v206
  %220 = vmatprep.subr.bf16.mxu0 0
  %221 = vmatpush1.bf16.msra.mxu0 %v205
  %222 = vmatprep.subr.bf16.mxu0 0
  %223 = vmatpush1.bf16.msra.mxu0 %v204
  %224 = vmatprep.subr.bf16.mxu0 0
  %225 = vmatpush1.bf16.msra.mxu0 %v203
  %226 = vmatprep.subr.bf16.mxu0 0
  %227 = vmatpush1.bf16.msra.mxu0 %v202
  %228 = vmatprep.subr.bf16.mxu0 0
  %229 = vmatpush1.bf16.msra.mxu0 %v201
  %230 = vmatprep.subr.bf16.mxu0 0
  %231 = vmatpush1.bf16.msra.mxu0 %v200
  %232 = vmatprep.subr.bf16.mxu0 0
  %233 = vmatpush2.bf16.msra.mxu0 0
  %234 = vmatprep.subr.bf16.mxu0 0
  %235 = vmatpush2.bf16.msra.mxu0 0
  %236 = vmatprep.subr.bf16.mxu0 0
  %237 = vmatpush2.bf16.msra.mxu0 0
  %238 = vmatprep.subr.bf16.mxu0 0
  %239 = vmatpush2.bf16.msra.mxu0 0
  %240 = vmatprep.subr.bf16.mxu0 0
  %241 = vmatpush2.bf16.msra.mxu0 0
  %242 = vmatprep.subr.bf16.mxu0 0
  %243 = vmatpush2.bf16.msra.mxu0 0
  %244 = vmatprep.subr.bf16.mxu0 0
  %245 = vmatpush2.bf16.msra.mxu0 0
  %246 = vmatprep.subr.bf16.mxu0 0
  %247 = vmatpush2.bf16.msra.mxu0 0
  %248 = vmatprep.mubr.bf16.mxu0 0
  %249 = vmatmul.mubr.bf16.gmra.mxu0 %v147
  %v250 = vpop.f32.mrf.mxu0
  %v251 = vadd.f32 %v167, %v250
  %v252 = vpop.f32.mrf.mxu0
  %v253 = vpop.f32.mrf.mxu0
  %v254 = vadd.f32 %v167, %v253
  %v255 = vpop.f32.mrf.mxu0
  %256 = vdwg.mxu0
  %v257 = vmax.f32 %v251, 0.0
  %v258 = vmax.f32 %v254, 0.0
  %v259 = vld [vmem:[%s4 + $0x4] sm:$0x1]
  %v260 = vld [vmem:[%s4 + $0x5] sm:$0x1]
  %v261 = vadd.f32 %v257, %v258
  %v262 = vrot.slane %v261, 4
  %v263 = vadd.f32 %v261, %v262
  %v264 = vrot.slane %v263, 2
  %v265 = vadd.f32 %v263, %v264
  %v266 = vrot.slane %v265, 1
  %v267 = vadd.f32 %v265, %v266
  %v268 = vmul.f32 %v267, 0.0625
  %v269 = vmul.f32 %v257, %v257
  %v270 = vmul.f32 %v258, %v258
  %v271 = vadd.f32 %v269, %v270
  %v272 = vrot.slane %v271, 4
  %v273 = vadd.f32 %v271, %v272
  %v274 = vrot.slane %v273, 2
  %v275 = vadd.f32 %v273, %v274
  %v276 = vrot.slane %v275, 1
  %v277 = vadd.f32 %v275, %v276
  %v278 = vmul.f32 %v277, 0.0625
  %v279 = vmul.f32 %v268, %v268
  %v280 = vsub.f32 %v278, %v279
  %v281 = vmax.f32 %v280, 0.0
  %v282 = vadd.f32 %v281, 1e-05
  %v283 = vrsqrt.pop %v282
  %v284 = vmul.f32 %v259, %v283
  %v285 = vmul.f32 %v268, %v284
  %v286 = vsub.f32 %v260, %v285
  %v287 = vlaneseq
  %v288 = vshrl.u32 %v287, 7
  %v289 = vsub.s32 0, %v288
  %v290 = vrot.slane %v284, %v289
  %v291 = vmul.f32 %v257, %v290
  %v292 = vmul.f32 %v258, %v290
  %v293 = vlaneseq
  %v294 = vshrl.u32 %v293, 7
  %v295 = vsub.s32 0, %v294
  %v296 = vrot.slane %v286, %v295
  %v297 = vadd.f32 %v291, %v296
  %v298 = vadd.f32 %v292, %v296
  %v299 = vld [vmem:[%s4 + $0x6] sm:$0x1]
  %v300 = vpack.c.bf16 %v298, %v297
  %v301 = vld [vmem:[%s3] sm:$0xf]
  %v302 = vld [vmem:[%s3 + $0x4] sm:$0xf]
  %v303 = vld [vmem:[%s3 + $0x8] sm:$0xf]
  %v304 = vld [vmem:[%s3 + $0xc] sm:$0xf]
  %v305 = vld [vmem:[%s3 + $0x10] sm:$0xf]
  %v306 = vld [vmem:[%s3 + $0x14] sm:$0xf]
  %v307 = vld [vmem:[%s3 + $0x18] sm:$0xf]
  %v308 = vld [vmem:[%s3 + $0x1c] sm:$0xf]
  %v309 = vld [vmem:[%s3 + $0x20] sm:$0xf]
  %v310 = vld [vmem:[%s3 + $0x24] sm:$0xf]
  %v311 = vld [vmem:[%s3 + $0x28] sm:$0xf]
  %v312 = vld [vmem:[%s3 + $0x2c] sm:$0xf]
  %v313 = vld [vmem:[%s3 + $0x30] sm:$0xf]
  %v314 = vld [vmem:[%s3 + $0x34] sm:$0xf]
  %v315 = vld [vmem:[%s3 + $0x38] sm:$0xf]
  %v316 = vld [vmem:[%s3 + $0x3c] sm:$0xf]
  %v317 = vlaneseq
  %v318 = vshrl.u32 %v317, 7
  %v319 = vsub.s32 0, %v318
  %v320 = vrot.slane %v299, %v319
  %v337 = vunpack.c.l.b16 %v301
  %v338 = vunpack.c.l.b16 %v302
  %v339 = vunpack.c.l.b16 %v303
  %v340 = vunpack.c.l.b16 %v304
  %v341 = vunpack.c.l.b16 %v305
  %v342 = vunpack.c.l.b16 %v306
  %v343 = vunpack.c.l.b16 %v307
  %v344 = vunpack.c.l.b16 %v308
  %v345 = vunpack.c.l.b16 %v309
  %v346 = vunpack.c.l.b16 %v310
  %v347 = vunpack.c.l.b16 %v311
  %v348 = vunpack.c.l.b16 %v312
  %v349 = vunpack.c.l.b16 %v313
  %v350 = vunpack.c.l.b16 %v314
  %v351 = vunpack.c.l.b16 %v315
  %v352 = vunpack.c.l.b16 %v316
  %v353 = vpack.c.b16 %v338, %v337
  %v354 = vpack.c.b16 %v340, %v339
  %v355 = vpack.c.b16 %v342, %v341
  %v356 = vpack.c.b16 %v344, %v343
  %v357 = vpack.c.b16 %v346, %v345
  %v358 = vpack.c.b16 %v348, %v347
  %v359 = vpack.c.b16 %v350, %v349
  %v360 = vpack.c.b16 %v352, %v351
  %369 = vmatprep.subr.bf16.mxu0 0
  %370 = vmatpush1.bf16.msra.mxu0 %v360
  %371 = vmatprep.subr.bf16.mxu0 0
  %372 = vmatpush1.bf16.msra.mxu0 %v359
  %373 = vmatprep.subr.bf16.mxu0 0
  %374 = vmatpush1.bf16.msra.mxu0 %v358
  %375 = vmatprep.subr.bf16.mxu0 0
  %376 = vmatpush1.bf16.msra.mxu0 %v357
  %377 = vmatprep.subr.bf16.mxu0 0
  %378 = vmatpush1.bf16.msra.mxu0 %v356
  %379 = vmatprep.subr.bf16.mxu0 0
  %380 = vmatpush1.bf16.msra.mxu0 %v355
  %381 = vmatprep.subr.bf16.mxu0 0
  %382 = vmatpush1.bf16.msra.mxu0 %v354
  %383 = vmatprep.subr.bf16.mxu0 0
  %384 = vmatpush1.bf16.msra.mxu0 %v353
  %385 = vmatprep.subr.bf16.mxu0 0
  %386 = vmatpush2.bf16.msra.mxu0 0
  %387 = vmatprep.subr.bf16.mxu0 0
  %388 = vmatpush2.bf16.msra.mxu0 0
  %389 = vmatprep.subr.bf16.mxu0 0
  %390 = vmatpush2.bf16.msra.mxu0 0
  %391 = vmatprep.subr.bf16.mxu0 0
  %392 = vmatpush2.bf16.msra.mxu0 0
  %393 = vmatprep.subr.bf16.mxu0 0
  %394 = vmatpush2.bf16.msra.mxu0 0
  %395 = vmatprep.subr.bf16.mxu0 0
  %396 = vmatpush2.bf16.msra.mxu0 0
  %397 = vmatprep.subr.bf16.mxu0 0
  %398 = vmatpush2.bf16.msra.mxu0 0
  %399 = vmatprep.subr.bf16.mxu0 0
  %400 = vmatpush2.bf16.msra.mxu0 0
  %401 = vmatprep.mubr.bf16.mxu0 0
  %402 = vmatmul.mubr.bf16.gmra.mxu0 %v300
  %v403 = vpop.f32.mrf.mxu0
  %v404 = vadd.f32 %v320, %v403
  %v405 = vpop.f32.mrf.mxu0
  %v406 = vpop.f32.mrf.mxu0
  %v407 = vadd.f32 %v320, %v406
  %v408 = vpop.f32.mrf.mxu0
  %409 = vdwg.mxu0
  %v410 = vmax.f32 %v404, 0.0
  %v411 = vmax.f32 %v407, 0.0
  %v412 = vld [vmem:[%s4 + $0x7] sm:$0x1]
  %v413 = vld [vmem:[%s4 + $0x8] sm:$0x1]
  %vm414 = vcmask 523264
  %v415 = vsel %vm414, %v410, 0.0
  %v416 = vsel %vm414, %v411, 0.0
  %v417 = vadd.f32 %v415, %v416
  %v418 = vrot.slane %v417, 4
  %v419 = vadd.f32 %v417, %v418
  %v420 = vrot.slane %v419, 2
  %v421 = vadd.f32 %v419, %v420
  %v422 = vrot.slane %v421, 1
  %v423 = vadd.f32 %v421, %v422
  %v424 = vmul.f32 %v423, 0.0625
  %v425 = vmul.f32 %v410, %v410
  %v426 = vmul.f32 %v411, %v411
  %v427 = vsel %vm414, %v425, 0.0
  %v428 = vsel %vm414, %v426, 0.0
  %v429 = vadd.f32 %v427, %v428
  %v430 = vrot.slane %v429, 4
  %v431 = vadd.f32 %v429, %v430
  %v432 = vrot.slane %v431, 2
  %v433 = vadd.f32 %v431, %v432
  %v434 = vrot.slane %v433, 1
  %v435 = vadd.f32 %v433, %v434
  %v436 = vmul.f32 %v435, 0.0625
  %v437 = vmul.f32 %v424, %v424
  %v438 = vsub.f32 %v436, %v437
  %v439 = vmax.f32 %v438, 0.0
  %v440 = vadd.f32 %v439, 1e-05
  %v441 = vrsqrt.pop %v440
  %v442 = vmul.f32 %v412, %v441
  %v443 = vmul.f32 %v424, %v442
  %v444 = vsub.f32 %v413, %v443
  %v445 = vlaneseq
  %v446 = vshrl.u32 %v445, 7
  %v447 = vsub.s32 0, %v446
  %v448 = vrot.slane %v442, %v447
  %v449 = vmul.f32 %v410, %v448
  %v450 = vmul.f32 %v411, %v448
  %v451 = vlaneseq
  %v452 = vshrl.u32 %v451, 7
  %v453 = vsub.s32 0, %v452
  %v454 = vrot.slane %v444, %v453
  %v455 = vadd.f32 %v449, %v454
  %v456 = vadd.f32 %v450, %v454
  %v457 = vld [vmem:[%s4 + $0x9] sm:$0x1]
  %v458 = vld [vmem:[%s4 + $0xa] sm:$0x1]
  %v459 = vlaneseq
  %v460 = vshrl.u32 %v459, 7
  %v461 = vsub.s32 0, %v460
  %v462 = vrot.slane %v457, %v461
  %v463 = vmul.f32 %v455, %v462
  %v464 = vmul.f32 %v456, %v462
  %v465 = vsel %vm414, %v463, 0.0
  %466 = vadd.xlane.f32.xlu0 %v465
  %v467 = vpop.xlane.xlu0 %466
  %v468 = vsel %vm414, %v464, 0.0
  %469 = vadd.xlane.f32.xlu0 %v468
  %v470 = vpop.xlane.xlu0 %469
  %v471 = vlaneseq
  %v472 = vshrl.u32 %v471, 7
  %v473 = vsub.s32 0, %v472
  %v474 = vrot.slane %v458, %v473
  %v475 = vadd.f32 %v467, %v474
  %v476 = vadd.f32 %v470, %v474
  %vm477 = vcmask 7168
  %478 = vst.msk [vmem:[%s5] sm:$0xff] %vm477, %v475
  %479 = vst.msk [vmem:[%s5 + $0x8] sm:$0xff] %vm477, %v476
  // Predicated region
  $region22: #{binary_classification_forward.1} parent=0 // pred_check
    _
  $region23: #{binary_classification_forward.1} parent=0 // pred_check_branch
    %481 = sbr.rel (0) target = $region25
  $region24: #{binary_classification_forward.1} parent=0 // pred_region
    _
  $region25: #{binary_classification_forward.1} parent=0 // pred_fallthru
    _
  // Predicated region
  $region26: #{binary_classification_forward.1} parent=0 // pred_check
    _
  $region27: #{binary_classification_forward.1} parent=0 // pred_check_branch
    %483 = sbr.rel (0) target = $region29
  $region28: #{binary_classification_forward.1} parent=0 // pred_region
    _
  $region29: #{binary_classification_forward.1} parent=0 // pred_fallthru
    _

</llo_original>
